<compile_context>
chip_gen: v6e
topology: v6e:2x2x1
jax: 0.10.0
libtpu: 0.0.40
codegen_flags: <defaults>
</compile_context>

<pallas_src>
import functools
import math

import jax
import jax.numpy as jnp
from jax.experimental import pallas as pl
from jax.experimental.pallas import tpu as pltpu


def _round_up(n, m):
    return ((n + m - 1) // m) * m


def _tpu_budget():
    """Returns (scoped-VMEM budget bytes, assumed TensorCores, default row tile)."""
    cap = None
    try:
        cap = int(pltpu.get_tpu_info().vmem_capacity_bytes)
    except Exception:  # info unavailable -> conservative (v7x-like) defaults
        cap = None
    if cap is None or cap <= 64 * 2 ** 20:
        # v7x-class (or unknown): leave headroom for Mosaic internal scratch instead of
        # requesting the entire 64 MiB; 2 TensorCores share the row axis.
        cap = cap if cap is not None else 64 * 2 ** 20
        return min(int(cap * 0.75), 48 * 2 ** 20), 2, 512
    # v5e / v6e: 128 MiB physical, single TensorCore -> allow large tiles.
    return min(int(cap * 0.85), 112 * 2 ** 20), 1, 1024


def _layer_norm_f32(x, gamma, beta, eps):
    x = x.astype(jnp.float32)
    mu = jnp.mean(x, axis=-1, keepdims=True)
    xc = x - mu
    var = jnp.mean(xc * xc, axis=-1, keepdims=True)
    return xc * jax.lax.rsqrt(var + eps) * gamma.astype(jnp.float32) + beta.astype(jnp.float32)


def _bias_relu(h_f32, b1_ref, compute_dtype, fast_epilogue):
    # TODO(synk): dropout_1 is identity in eval mode; training would use pltpu.prng_* here.
    if fast_epilogue:
        # bf16 epilogue: halves VPU traffic / VMEM footprint of the (tm, tf) intermediate.
        h = h_f32.astype(compute_dtype) + b1_ref[...].astype(compute_dtype)
        return jnp.maximum(h, jnp.array(0, dtype=compute_dtype))
    h = jnp.maximum(h_f32 + b1_ref[...].astype(jnp.float32), 0.0)
    return h.astype(compute_dtype)


def ffn_kernel_resident(x_ref, gamma_ref, beta_ref, w1_ref, b1_ref, w2_ref, b2_ref,
                        o_ref, *, eps, compute_dtype, fast_epilogue):
    """Weights fully VMEM-resident (constant index_map): one pass per row block."""
    xn = _layer_norm_f32(x_ref[...], gamma_ref[...], beta_ref[...], eps).astype(compute_dtype)
    h = jnp.dot(xn, w1_ref[...], preferred_element_type=jnp.float32)
    h = _bias_relu(h, b1_ref, compute_dtype, fast_epilogue)
    y = jnp.dot(h, w2_ref[...], preferred_element_type=jnp.float32)
    # TODO(synk): dropout_2 likewise identity in eval mode.
    o_ref[...] = (y + b2_ref[...].astype(jnp.float32)).astype(o_ref.dtype)


def ffn_kernel_chunked(x_ref, gamma_ref, beta_ref, w1_ref, b1_ref, w2_ref, b2_ref,
                       o_ref, acc_ref, xn_ref, *, eps, compute_dtype, fast_epilogue):
    """d_ff streamed in chunks (reduction axis last in grid) with an f32 accumulator."""
    j = pl.program_id(1)

    @pl.when(j == 0)
    def _():
        xn_ref[...] = _layer_norm_f32(x_ref[...], gamma_ref[...], beta_ref[...], eps
                                      ).astype(xn_ref.dtype)
        acc_ref[...] = jnp.zeros_like(acc_ref)

    h = jnp.dot(xn_ref[...], w1_ref[...], preferred_element_type=jnp.float32)
    h = _bias_relu(h, b1_ref, compute_dtype, fast_epilogue)
    acc_ref[...] += jnp.dot(h, w2_ref[...], preferred_element_type=jnp.float32)

    @pl.when(j == pl.num_programs(1) - 1)
    def _():
        o_ref[...] = (acc_ref[...] + b2_ref[...].astype(jnp.float32)).astype(o_ref.dtype)


def position_wise_ffn(x, gamma, beta, w1, b1, w2, b2, *,
                      eps=1e-6, compute_dtype=None, row_tile=None, ff_tile=512,
                      use_resident=None):
    """x: [B, S, d_model] -> [B, S, d_model].  Eval-mode forward of the PyTorch module.

    compute_dtype: matmul operand dtype (f32 accumulation always).  Defaults to bf16
    for bf16 inputs and f32 otherwise; pass jnp.bfloat16 explicitly for an opt-in
    mixed-precision path on f32 models.  For production, cast (and pad) the weights to
    compute_dtype once at parameter-load time — the pad/cast below is skipped when the
    weights are already prepared, so no per-call HBM traffic is added.
    """
    B, S, d_model = x.shape
    d_ff = w1.shape[1]
    N = B * S

    if compute_dtype is None:
        compute_dtype = jnp.bfloat16 if x.dtype == jnp.bfloat16 else jnp.float32
    compute_dtype = jnp.dtype(compute_dtype)
    fast_epilogue = compute_dtype == jnp.dtype(jnp.bfloat16)
    c_sz = compute_dtype.itemsize
    x_sz = jnp.dtype(x.dtype).itemsize

    budget, num_cores, default_row_tile = _tpu_budget()

    # Row alignment: 16 sublanes for sub-32-bit operand dtypes (packed rows), else 8.
    row_align = 16 if min(c_sz, x_sz) < 4 else 8

    if row_tile is None:
        row_tile = default_row_tile
    tm = min(_round_up(row_tile, row_align), _round_up(N, row_align))
    if num_cores > 1:
        # Megacore balance (v7x): keep at least one row block per TensorCore.
        tm = min(tm, _round_up(pl.cdiv(N, num_cores), row_align))
    tm = max(tm, row_align)

    small = 2 * (3 * d_model + max(d_ff, 128)) * 4 + 2 * 2 ** 20  # affine/bias blocks + slack

    def resident_bytes(tm_):
        return (2 * 2 * d_model * d_ff * c_sz        # w1 + w2 (double-buffered)
                + 4 * tm_ * d_model * x_sz           # x + out blocks (double-buffered)
                + tm_ * d_ff * (4 + c_sz)            # f32 dot result + compute-dtype copy
                + 2 * tm_ * d_model * 4              # layernorm f32 temporaries
                + small)

    def chunked_bytes(tm_, tf_):
        return (2 * 2 * d_model * tf_ * c_sz         # w1 / w2 chunks (double-buffered)
                + 4 * tm_ * d_model * x_sz           # x + out blocks
                + tm_ * d_model * (4 + c_sz)         # acc + cached-layernorm scratch
                + tm_ * tf_ * (4 + c_sz)             # hidden intermediate
                + 2 * tm_ * d_model * 4              # layernorm f32 temporaries
                + small)

    def shrink_tm(t, cost):
        while t > row_align and cost(t) > budget:
            t = max(row_align, _round_up(t // 2, row_align))
        return t

    if use_resident is None:
        tm_res = shrink_tm(tm, resident_bytes)
        resident = resident_bytes(tm_res) <= budget
    elif use_resident:
        tm_res = shrink_tm(tm, resident_bytes)
        resident = True
    else:
        resident = False

    x2 = x.reshape(N, d_model)
    gamma2 = gamma.reshape(1, d_model)
    beta2 = beta.reshape(1, d_model)
    b2_2 = b2.reshape(1, d_model)

    if resident:
        # ---------------- resident-weights fast path ----------------
        tm = tm_res
        n_pad = _round_up(N, tm)
        if n_pad != N:
            x2 = jnp.pad(x2, ((0, n_pad - N), (0, 0)))
        w1p = w1 if w1.dtype == compute_dtype else w1.astype(compute_dtype)
        w2p = w2 if w2.dtype == compute_dtype else w2.astype(compute_dtype)
        b1_2 = b1.reshape(1, d_ff)

        kernel = functools.partial(ffn_kernel_resident, eps=eps,
                                   compute_dtype=compute_dtype,
                                   fast_epilogue=fast_epilogue)
        out2 = pl.pallas_call(
            kernel,
            out_shape=jax.ShapeDtypeStruct((n_pad, d_model), x.dtype),
            grid_spec=pltpu.PrefetchScalarGridSpec(
                num_scalar_prefetch=0,
                grid=(n_pad // tm,),
                in_specs=[
                    pl.BlockSpec((tm, d_model), lambda i: (i, 0)),      # x rows
                    pl.BlockSpec((1, d_model), lambda i: (0, 0)),       # gamma
                    pl.BlockSpec((1, d_model), lambda i: (0, 0)),       # beta
                    pl.BlockSpec((d_model, d_ff), lambda i: (0, 0)),    # w1 (resident)
                    pl.BlockSpec((1, d_ff), lambda i: (0, 0)),          # b1
                    pl.BlockSpec((d_ff, d_model), lambda i: (0, 0)),    # w2 (resident)
                    pl.BlockSpec((1, d_model), lambda i: (0, 0)),       # b2
                ],
                out_specs=pl.BlockSpec((tm, d_model), lambda i: (i, 0)),
            ),
            compiler_params=pltpu.CompilerParams(
                dimension_semantics=("parallel",),
                vmem_limit_bytes=int(budget),
            ),
        )(x2, gamma2, beta2, w1p, b1_2, w2p, b2_2)
    else:
        # ---------------- chunked (streamed-weight) fallback ----------------
        def pick_tf(limit):
            limit = max(128, (min(limit, d_ff) // 128) * 128)
            if d_ff <= limit:
                return d_ff, d_ff
            c = limit
            while c >= 128:
                if d_ff % c == 0:
                    return c, d_ff                  # divisor of d_ff -> no padding
                c -= 128
            return limit, _round_up(d_ff, limit)    # fall back to zero-padding d_ff

        tf, dff_pad = pick_tf(ff_tile)
        while tf > 128 and chunked_bytes(tm, tf) > budget:
            tf, dff_pad = pick_tf(tf // 2)
        tm = shrink_tm(tm, lambda t: chunked_bytes(t, tf))

        n_pad = _round_up(N, tm)
        if n_pad != N:
            x2 = jnp.pad(x2, ((0, n_pad - N), (0, 0)))

        w1p, b1p, w2p = w1, b1, w2
        if dff_pad != d_ff:
            # Zero-padded d_ff columns/rows contribute exactly 0 to the output.
            w1p = jnp.pad(w1, ((0, 0), (0, dff_pad - d_ff)))
            b1p = jnp.pad(b1, ((0, dff_pad - d_ff),))
            w2p = jnp.pad(w2, ((0, dff_pad - d_ff), (0, 0)))
        if w1p.dtype != compute_dtype:
            w1p = w1p.astype(compute_dtype)
        if w2p.dtype != compute_dtype:
            w2p = w2p.astype(compute_dtype)
        b1_2 = b1p.reshape(1, dff_pad)

        kernel = functools.partial(ffn_kernel_chunked, eps=eps,
                                   compute_dtype=compute_dtype,
                                   fast_epilogue=fast_epilogue)
        out2 = pl.pallas_call(
            kernel,
            out_shape=jax.ShapeDtypeStruct((n_pad, d_model), x.dtype),
            grid_spec=pltpu.PrefetchScalarGridSpec(
                num_scalar_prefetch=0,
                grid=(n_pad // tm, dff_pad // tf),
                in_specs=[
                    pl.BlockSpec((tm, d_model), lambda i, j: (i, 0)),   # x rows
                    pl.BlockSpec((1, d_model), lambda i, j: (0, 0)),    # gamma
                    pl.BlockSpec((1, d_model), lambda i, j: (0, 0)),    # beta
                    pl.BlockSpec((d_model, tf), lambda i, j: (0, j)),   # w1 chunk
                    pl.BlockSpec((1, tf), lambda i, j: (0, j)),         # b1 chunk
                    pl.BlockSpec((tf, d_model), lambda i, j: (j, 0)),   # w2 chunk
                    pl.BlockSpec((1, d_model), lambda i, j: (0, 0)),    # b2
                ],
                out_specs=pl.BlockSpec((tm, d_model), lambda i, j: (i, 0)),
                scratch_shapes=[
                    pltpu.VMEM((tm, d_model), jnp.float32),      # f32 output accumulator
                    pltpu.VMEM((tm, d_model), compute_dtype),    # cached layernorm output
                ],
            ),
            compiler_params=pltpu.CompilerParams(
                dimension_semantics=("parallel", "arbitrary"),
                vmem_limit_bytes=int(budget),
            ),
        )(x2, gamma2, beta2, w1p, b1_2, w2p, b2_2)

    return out2[:N].reshape(B, S, d_model)


def reference_ffn(x, gamma, beta, w1, b1, w2, b2, eps=1e-6):
    xf = x.astype(jnp.float32)
    mu = jnp.mean(xf, axis=-1, keepdims=True)
    var = jnp.mean((xf - mu) ** 2, axis=-1, keepdims=True)
    xn = (xf - mu) / jnp.sqrt(var + eps) * gamma + beta
    h = jnp.maximum(xn @ w1 + b1, 0.0)
    return (h @ w2 + b2).astype(x.dtype)


def _make_params(key, d_model, d_ff):
    kw1, kb1, kw2, kb2 = jax.random.split(key, 4)
    bound1 = 1.0 / math.sqrt(d_model)
    bound2 = 1.0 / math.sqrt(d_ff)
    w1 = jax.random.uniform(kw1, (d_model, d_ff), minval=-bound1, maxval=bound1,
                            dtype=jnp.float32)
    b1 = jax.random.uniform(kb1, (d_ff,), minval=-bound1, maxval=bound1, dtype=jnp.float32)
    w2 = jax.random.uniform(kw2, (d_ff, d_model), minval=-bound2, maxval=bound2,
                            dtype=jnp.float32)
    b2 = jax.random.uniform(kb2, (d_model,), minval=-bound2, maxval=bound2, dtype=jnp.float32)
    gamma = jnp.ones((d_model,), dtype=jnp.float32)
    beta = jnp.zeros((d_model,), dtype=jnp.float32)
    return w1, b1, w2, b2, gamma, beta


if __name__ == "__main__":
    key = jax.random.PRNGKey(0)

    # Test 1: small shapes consistent with the module (resident-weights fast path).
    B, S, d_model, d_ff = 2, 8, 32, 64
    k1, k2, key = jax.random.split(key, 3)
    x = jax.random.normal(k1, (B, S, d_model), dtype=jnp.float32)
    w1, b1, w2, b2, gamma, beta = _make_params(k2, d_model, d_ff)
    out = jax.block_until_ready(position_wise_ffn(x, gamma, beta, w1, b1, w2, b2))
    ref = reference_ffn(x, gamma, beta, w1, b1, w2, b2)
    assert out.shape == (B, S, d_model)
    assert jnp.allclose(out, ref, atol=1e-4, rtol=1e-4)

    # Test 2: bigger model, auto path (resident weights expected); N=272 rows.
    B, S, d_model, d_ff = 2, 136, 128, 1280
    k1, k2, key = jax.random.split(key, 3)
    x = jax.random.normal(k1, (B, S, d_model), dtype=jnp.float32)
    w1, b1, w2, b2, gamma, beta = _make_params(k2, d_model, d_ff)
    out = jax.block_until_ready(position_wise_ffn(x, gamma, beta, w1, b1, w2, b2))
    ref = reference_ffn(x, gamma, beta, w1, b1, w2, b2)
    assert out.shape == (B, S, d_model)
    assert jnp.allclose(out, ref, atol=1e-3, rtol=1e-3)

    # Test 3: force the chunked path; exercises row padding (272 -> 384) and d_ff
    # chunking with a divisor tile (tf=256 for d_ff=1280, no weight padding).
    out = jax.block_until_ready(position_wise_ffn(
        x, gamma, beta, w1, b1, w2, b2, use_resident=False, row_tile=128, ff_tile=512))
    assert jnp.allclose(out, ref, atol=1e-3, rtol=1e-3)

    # Test 4: chunked path with d_ff=1000 (not a multiple of 128) -> zero-padded d_ff.
    B, S, d_model, d_ff = 2, 136, 128, 1000
    k1, k2, key = jax.random.split(key, 3)
    x = jax.random.normal(k1, (B, S, d_model), dtype=jnp.float32)
    w1, b1, w2, b2, gamma, beta = _make_params(k2, d_model, d_ff)
    out = jax.block_until_ready(position_wise_ffn(
        x, gamma, beta, w1, b1, w2, b2, use_resident=False, row_tile=256, ff_tile=512))
    ref = reference_ffn(x, gamma, beta, w1, b1, w2, b2)
    assert jnp.allclose(out, ref, atol=1e-3, rtol=1e-3)

    # Test 5: bf16 inputs (bf16 operands / f32 accumulation, bf16 epilogue).
    B, S, d_model, d_ff = 2, 8, 32, 64
    k1, k2, key = jax.random.split(key, 3)
    xb = jax.random.normal(k1, (B, S, d_model), dtype=jnp.float32).astype(jnp.bfloat16)
    w1, b1, w2, b2, gamma, beta = _make_params(k2, d_model, d_ff)
    outb = jax.block_until_ready(position_wise_ffn(xb, gamma, beta, w1, b1, w2, b2))
    refb = reference_ffn(xb, gamma, beta, w1, b1, w2, b2)
    assert outb.dtype == jnp.bfloat16
    assert jnp.allclose(outb.astype(jnp.float32), refb.astype(jnp.float32),
                        atol=1e-1, rtol=1e-1)

    print("KERNEL_OK")
</pallas_src>

<mosaic_0001>
module attributes {stable_mosaic.version = 11 : i64} {
  func.func @ffn_kernel_resident(%arg0: i32, %arg1: memref<8x32xf32, #tpu.memory_space<vmem>>, %arg2: memref<1x32xf32, #tpu.memory_space<vmem>>, %arg3: memref<1x32xf32, #tpu.memory_space<vmem>>, %arg4: memref<32x64xf32, #tpu.memory_space<vmem>>, %arg5: memref<1x64xf32, #tpu.memory_space<vmem>>, %arg6: memref<64x32xf32, #tpu.memory_space<vmem>>, %arg7: memref<1x32xf32, #tpu.memory_space<vmem>>, %arg8: memref<8x32xf32, #tpu.memory_space<vmem>>) attributes {dimension_semantics = [#tpu.dimension_semantics<parallel>], iteration_bounds = array<i64: 2>, scalar_prefetch = 0 : i64, scratch_operands = 0 : i64, tpu.core_type = #tpu.core_type<tc>, window_params = [{transform_indices = @transform_0, window_bounds = array<i64: 8, 32>}, {pipeline_mode = #tpu.pipeline_mode<synchronous>, transform_indices = @transform_1, window_bounds = array<i64: 1, 32>}, {pipeline_mode = #tpu.pipeline_mode<synchronous>, transform_indices = @transform_2, window_bounds = array<i64: 1, 32>}, {pipeline_mode = #tpu.pipeline_mode<synchronous>, transform_indices = @transform_3, window_bounds = array<i64: 32, 64>}, {pipeline_mode = #tpu.pipeline_mode<synchronous>, transform_indices = @transform_4, window_bounds = array<i64: 1, 64>}, {pipeline_mode = #tpu.pipeline_mode<synchronous>, transform_indices = @transform_5, window_bounds = array<i64: 64, 32>}, {pipeline_mode = #tpu.pipeline_mode<synchronous>, transform_indices = @transform_6, window_bounds = array<i64: 1, 32>}, {transform_indices = @transform_7, window_bounds = array<i64: 8, 32>}]} {
    %c0 = arith.constant 0 : index
    %c0_0 = arith.constant 0 : index
    %0 = vector.load %arg1[%c0, %c0_0] : memref<8x32xf32, #tpu.memory_space<vmem>>, vector<8x32xf32>
    %c0_1 = arith.constant 0 : index
    %c0_2 = arith.constant 0 : index
    %1 = vector.load %arg2[%c0_1, %c0_2] : memref<1x32xf32, #tpu.memory_space<vmem>>, vector<1x32xf32>
    %c0_3 = arith.constant 0 : index
    %c0_4 = arith.constant 0 : index
    %2 = vector.load %arg3[%c0_3, %c0_4] : memref<1x32xf32, #tpu.memory_space<vmem>>, vector<1x32xf32>
    %cst = arith.constant dense<0.000000e+00> : vector<8xf32>
    %3 = vector.multi_reduction <add>, %0, %cst [1] : vector<8x32xf32> to vector<8xf32>
    %4 = vector.shape_cast %3 : vector<8xf32> to vector<8x1xf32>
    %cst_5 = arith.constant 3.200000e+01 : f32
    %5 = vector.broadcast %cst_5 : f32 to vector<8x1xf32>
    %6 = arith.divf %4, %5 : vector<8x1xf32>
    %7 = vector.broadcast %6 : vector<8x1xf32> to vector<8x32xf32>
    %8 = arith.subf %0, %7 : vector<8x32xf32>
    %9 = arith.mulf %8, %8 : vector<8x32xf32>
    %cst_6 = arith.constant dense<0.000000e+00> : vector<8xf32>
    %10 = vector.multi_reduction <add>, %9, %cst_6 [1] : vector<8x32xf32> to vector<8xf32>
    %11 = vector.shape_cast %10 : vector<8xf32> to vector<8x1xf32>
    %cst_7 = arith.constant 3.200000e+01 : f32
    %12 = vector.broadcast %cst_7 : f32 to vector<8x1xf32>
    %13 = arith.divf %11, %12 : vector<8x1xf32>
    %cst_8 = arith.constant 9.99999997E-7 : f32
    %14 = vector.broadcast %cst_8 : f32 to vector<8x1xf32>
    %15 = arith.addf %13, %14 : vector<8x1xf32>
    %16 = math.rsqrt %15 : vector<8x1xf32>
    %17 = vector.broadcast %16 : vector<8x1xf32> to vector<8x32xf32>
    %18 = arith.mulf %8, %17 : vector<8x32xf32>
    %19 = vector.broadcast %1 : vector<1x32xf32> to vector<8x32xf32>
    %20 = arith.mulf %18, %19 : vector<8x32xf32>
    %21 = vector.broadcast %2 : vector<1x32xf32> to vector<8x32xf32>
    %22 = arith.addf %20, %21 : vector<8x32xf32>
    %c0_9 = arith.constant 0 : index
    %c0_10 = arith.constant 0 : index
    %23 = vector.load %arg4[%c0_9, %c0_10] : memref<32x64xf32, #tpu.memory_space<vmem>>, vector<32x64xf32>
    %cst_11 = arith.constant dense<0.000000e+00> : vector<8x64xf32>
    %24 = tpu.matmul %22, %23, %cst_11 {dimension_numbers = #tpu.dot_dimension_numbers<[1], [0], [0], [1], [0, 0, 1, 1], [], []>} : vector<8x32xf32>, vector<32x64xf32>, vector<8x64xf32> -> vector<8x64xf32>
    %c0_12 = arith.constant 0 : index
    %c0_13 = arith.constant 0 : index
    %25 = vector.load %arg5[%c0_12, %c0_13] : memref<1x64xf32, #tpu.memory_space<vmem>>, vector<1x64xf32>
    %26 = vector.broadcast %25 : vector<1x64xf32> to vector<8x64xf32>
    %27 = arith.addf %24, %26 : vector<8x64xf32>
    %cst_14 = arith.constant 0.000000e+00 : f32
    %28 = vector.broadcast %cst_14 : f32 to vector<8x64xf32>
    %29 = arith.maximumf %27, %28 : vector<8x64xf32>
    %c0_15 = arith.constant 0 : index
    %c0_16 = arith.constant 0 : index
    %30 = vector.load %arg6[%c0_15, %c0_16] : memref<64x32xf32, #tpu.memory_space<vmem>>, vector<64x32xf32>
    %cst_17 = arith.constant dense<0.000000e+00> : vector<8x32xf32>
    %31 = tpu.matmul %29, %30, %cst_17 {dimension_numbers = #tpu.dot_dimension_numbers<[1], [0], [0], [1], [0, 0, 1, 1], [], []>} : vector<8x64xf32>, vector<64x32xf32>, vector<8x32xf32> -> vector<8x32xf32>
    %c0_18 = arith.constant 0 : index
    %c0_19 = arith.constant 0 : index
    %32 = vector.load %arg7[%c0_18, %c0_19] : memref<1x32xf32, #tpu.memory_space<vmem>>, vector<1x32xf32>
    %33 = vector.broadcast %32 : vector<1x32xf32> to vector<8x32xf32>
    %34 = arith.addf %31, %33 : vector<8x32xf32>
    %c0_20 = arith.constant 0 : index
    %c0_21 = arith.constant 0 : index
    %35 = vector.load %arg8[%c0_20, %c0_21] : memref<8x32xf32, #tpu.memory_space<vmem>>, vector<8x32xf32>
    tpu.vector_store %arg8[%c0_20, %c0_21], %34 {strides = array<i32>} : memref<8x32xf32, #tpu.memory_space<vmem>>, vector<8x32xf32>,
    return
  }
  func.func @transform_0(%arg0: i32) -> (i32, i32) {
    %c0_i32 = arith.constant 0 : i32
    %c0_i32_0 = arith.constant 0 : i32
    return %arg0, %c0_i32 : i32, i32
  }
  func.func @transform_1(%arg0: i32) -> (i32, i32) {
    %c0_i32 = arith.constant 0 : i32
    %c0_i32_0 = arith.constant 0 : i32
    %c0_i32_1 = arith.constant 0 : i32
    return %c0_i32, %c0_i32_0 : i32, i32
  }
  func.func @transform_2(%arg0: i32) -> (i32, i32) {
    %c0_i32 = arith.constant 0 : i32
    %c0_i32_0 = arith.constant 0 : i32
    %c0_i32_1 = arith.constant 0 : i32
    return %c0_i32, %c0_i32_0 : i32, i32
  }
  func.func @transform_3(%arg0: i32) -> (i32, i32) {
    %c0_i32 = arith.constant 0 : i32
    %c0_i32_0 = arith.constant 0 : i32
    %c0_i32_1 = arith.constant 0 : i32
    return %c0_i32, %c0_i32_0 : i32, i32
  }
  func.func @transform_4(%arg0: i32) -> (i32, i32) {
    %c0_i32 = arith.constant 0 : i32
    %c0_i32_0 = arith.constant 0 : i32
    %c0_i32_1 = arith.constant 0 : i32
    return %c0_i32, %c0_i32_0 : i32, i32
  }
  func.func @transform_5(%arg0: i32) -> (i32, i32) {
    %c0_i32 = arith.constant 0 : i32
    %c0_i32_0 = arith.constant 0 : i32
    %c0_i32_1 = arith.constant 0 : i32
    return %c0_i32, %c0_i32_0 : i32, i32
  }
  func.func @transform_6(%arg0: i32) -> (i32, i32) {
    %c0_i32 = arith.constant 0 : i32
    %c0_i32_0 = arith.constant 0 : i32
    %c0_i32_1 = arith.constant 0 : i32
    return %c0_i32, %c0_i32_0 : i32, i32
  }
  func.func @transform_7(%arg0: i32) -> (i32, i32) {
    %c0_i32 = arith.constant 0 : i32
    %c0_i32_0 = arith.constant 0 : i32
    return %arg0, %c0_i32 : i32, i32
  }
}

</mosaic_0001>

<llo_original>
// kernel: tpu_custom_call.1
$region0: #{tpu_custom_call.1}
  #allocation0 [shape = 'u32[]', space=smem, size = 0x4, offset = 0x4, fixed_abs, tag = 'smem constant byte address 0x4 - core index']
  #allocation1 [shape = 'u32[144,128]{1,0:T(1,128)}', space=vmem, size = 0x12000, scoped, tag = 'internal scratch']
  %s0 = inlined_call_operand.vmem [shape: f32[16,32], index: 0, kind: input, shape index: {}]
  %s1 = inlined_call_operand.vmem [shape: f32[1,32], index: 1, kind: input, shape index: {}]
  %s2 = inlined_call_operand.vmem [shape: f32[1,32], index: 2, kind: input, shape index: {}]
  %s3 = inlined_call_operand.vmem [shape: f32[32,64], index: 3, kind: input, shape index: {}]
  %s4 = inlined_call_operand.vmem [shape: f32[1,64], index: 4, kind: input, shape index: {}]
  %s5 = inlined_call_operand.vmem [shape: f32[64,32], index: 5, kind: input, shape index: {}]
  %s6 = inlined_call_operand.vmem [shape: f32[1,32], index: 6, kind: input, shape index: {}]
  %s7 = inlined_call_operand.hbm [shape: f32[16,32], index: 7, kind: output, shape index: {}]
  %s8 = sld [smem:[#allocation0]]
  $region61: #{tpu_custom_call.1} parent=0
    _
  %s10 = ssub.s32 1, %s8
  %s11 = scalar_select 0, %s10, %s8
  $region1: #{tpu_custom_call.1} parent=0
    #allocation2 [shape = 'u8[8192]{0}', space=vmem, size = 0x2000, scoped, tag = 'output window, operand 0']
    #allocation3 [shape = 's32[2]{0}', space=sflag, size = 0x8, scoped, tag = 'scoped memory for tpu_custom_call.1']
    %12 = vsyncpa [#allocation3], 0
    %s13 = scalar_lea.sflag [#allocation3], 1
    %14 = vsyncpa %s13, 0
    loop: start=0, step=1, limit=4
    $region2: #{tpu_custom_call.1} parent=1 // loop_pre_header
      _
    $region3: #{tpu_custom_call.1} parent=1 // loop_header
      %s16 = sphi 0, %s20
      %p17 = scmp.ge.s32.totalorder %s16, 4
      %s26 = sphi 0, %s28
      %s29 = sphi 0, %s26
      %s30 = sphi 0, %s29
      %s46 = sphi 0, %s30
      %s50 = sphi 0, %s50
      %s52 = sphi 0, %s50
      %s53 = sphi 0, %s52
      %s67 = sphi 0, %s53
      %s71 = sphi 0, %s71
      %s73 = sphi 0, %s71
      %s74 = sphi 0, %s73
      %s88 = sphi 0, %s74
      %s92 = sphi 0, %s92
      %s94 = sphi 0, %s92
      %s95 = sphi 0, %s94
      %s109 = sphi 0, %s95
      %s113 = sphi 0, %s113
      %s115 = sphi 0, %s113
      %s116 = sphi 0, %s115
      %s130 = sphi 0, %s116
      %s134 = sphi 0, %s134
      %s136 = sphi 0, %s134
      %s137 = sphi 0, %s136
      %s151 = sphi 0, %s137
      %s155 = sphi 0, %s155
      %s157 = sphi 0, %s155
      %s158 = sphi 0, %s157
      %s172 = sphi 0, %s158
      %s178 = sphi 0, %s180
      %s181 = sphi 0, %s178
      %s182 = sphi 0, %s181
      %s198 = sphi 0, %s182
    $region4: #{tpu_custom_call.1} parent=1 // loop_header_branch
      %19 = sbr.rel (%p17) target = $region8
    $region5: #{tpu_custom_call.1} parent=1 // loop_body
      %s21 = ssub.s32 %s16, 1
      %s22 = ssub.s32 %s16, 2
      %s23 = sadd.s32 %s16, 1
      %s24 = ssub.s32 %s16, %s23
      %p25 = scmp.eq.s32.totalorder %s24, 0
      %s27 = sadd.s32 %s26, 1
      %s28 = scalar_select %p25, %s26, %s27
      %p31 = pneg %p25
      %p32 = scmp.eq.s32.totalorder %s16, 1
      %p33 = por %p31, %p32
      %p34 = scmp.ne.s32.totalorder %s26, %s29
      %p35 = scmp.eq.s32.totalorder %s16, 0
      %p36 = por %p34, %p35
      %p37 = scmp.ne.s32.totalorder %s26, %s29
      %p38 = scmp.eq.s32.totalorder %s21, 1
      %p39 = por %p37, %p38
      %p40 = scmp.ne.s32.totalorder %s29, %s30
      %p41 = scmp.eq.s32.totalorder %s21, 0
      %p42 = por %p40, %p41
      %p43 = scmp.ne.s32.totalorder %s29, %s30
      %p44 = scmp.eq.s32.totalorder %s22, 1
      %p45 = por %p43, %p44
      %p47 = scmp.ne.s32.totalorder %s30, %s46
      %p48 = scmp.eq.s32.totalorder %s22, 0
      %p49 = por %p47, %p48
      %s51 = sadd.s32 %s50, 1
      %p54 = scmp.eq.s32.totalorder %s16, 1
      %p55 = scmp.ne.s32.totalorder %s50, %s52
      %p56 = scmp.eq.s32.totalorder %s16, 0
      %p57 = por %p55, %p56
      %p58 = scmp.ne.s32.totalorder %s50, %s52
      %p59 = scmp.eq.s32.totalorder %s21, 1
      %p60 = por %p58, %p59
      %p61 = scmp.ne.s32.totalorder %s52, %s53
      %p62 = scmp.eq.s32.totalorder %s21, 0
      %p63 = por %p61, %p62
      %p64 = scmp.ne.s32.totalorder %s52, %s53
      %p65 = scmp.eq.s32.totalorder %s22, 1
      %p66 = por %p64, %p65
      %p68 = scmp.ne.s32.totalorder %s53, %s67
      %p69 = scmp.eq.s32.totalorder %s22, 0
      %p70 = por %p68, %p69
      %s72 = sadd.s32 %s71, 1
      %p75 = scmp.eq.s32.totalorder %s16, 1
      %p76 = scmp.ne.s32.totalorder %s71, %s73
      %p77 = scmp.eq.s32.totalorder %s16, 0
      %p78 = por %p76, %p77
      %p79 = scmp.ne.s32.totalorder %s71, %s73
      %p80 = scmp.eq.s32.totalorder %s21, 1
      %p81 = por %p79, %p80
      %p82 = scmp.ne.s32.totalorder %s73, %s74
      %p83 = scmp.eq.s32.totalorder %s21, 0
      %p84 = por %p82, %p83
      %p85 = scmp.ne.s32.totalorder %s73, %s74
      %p86 = scmp.eq.s32.totalorder %s22, 1
      %p87 = por %p85, %p86
      %p89 = scmp.ne.s32.totalorder %s74, %s88
      %p90 = scmp.eq.s32.totalorder %s22, 0
      %p91 = por %p89, %p90
      %s93 = sadd.s32 %s92, 1
      %p96 = scmp.eq.s32.totalorder %s16, 1
      %p97 = scmp.ne.s32.totalorder %s92, %s94
      %p98 = scmp.eq.s32.totalorder %s16, 0
      %p99 = por %p97, %p98
      %p100 = scmp.ne.s32.totalorder %s92, %s94
      %p101 = scmp.eq.s32.totalorder %s21, 1
      %p102 = por %p100, %p101
      %p103 = scmp.ne.s32.totalorder %s94, %s95
      %p104 = scmp.eq.s32.totalorder %s21, 0
      %p105 = por %p103, %p104
      %p106 = scmp.ne.s32.totalorder %s94, %s95
      %p107 = scmp.eq.s32.totalorder %s22, 1
      %p108 = por %p106, %p107
      %p110 = scmp.ne.s32.totalorder %s95, %s109
      %p111 = scmp.eq.s32.totalorder %s22, 0
      %p112 = por %p110, %p111
      %s114 = sadd.s32 %s113, 1
      %p117 = scmp.eq.s32.totalorder %s16, 1
      %p118 = scmp.ne.s32.totalorder %s113, %s115
      %p119 = scmp.eq.s32.totalorder %s16, 0
      %p120 = por %p118, %p119
      %p121 = scmp.ne.s32.totalorder %s113, %s115
      %p122 = scmp.eq.s32.totalorder %s21, 1
      %p123 = por %p121, %p122
      %p124 = scmp.ne.s32.totalorder %s115, %s116
      %p125 = scmp.eq.s32.totalorder %s21, 0
      %p126 = por %p124, %p125
      %p127 = scmp.ne.s32.totalorder %s115, %s116
      %p128 = scmp.eq.s32.totalorder %s22, 1
      %p129 = por %p127, %p128
      %p131 = scmp.ne.s32.totalorder %s116, %s130
      %p132 = scmp.eq.s32.totalorder %s22, 0
      %p133 = por %p131, %p132
      %s135 = sadd.s32 %s134, 1
      %p138 = scmp.eq.s32.totalorder %s16, 1
      %p139 = scmp.ne.s32.totalorder %s134, %s136
      %p140 = scmp.eq.s32.totalorder %s16, 0
      %p141 = por %p139, %p140
      %p142 = scmp.ne.s32.totalorder %s134, %s136
      %p143 = scmp.eq.s32.totalorder %s21, 1
      %p144 = por %p142, %p143
      %p145 = scmp.ne.s32.totalorder %s136, %s137
      %p146 = scmp.eq.s32.totalorder %s21, 0
      %p147 = por %p145, %p146
      %p148 = scmp.ne.s32.totalorder %s136, %s137
      %p149 = scmp.eq.s32.totalorder %s22, 1
      %p150 = por %p148, %p149
      %p152 = scmp.ne.s32.totalorder %s137, %s151
      %p153 = scmp.eq.s32.totalorder %s22, 0
      %p154 = por %p152, %p153
      %s156 = sadd.s32 %s155, 1
      %p159 = scmp.eq.s32.totalorder %s16, 1
      %p160 = scmp.ne.s32.totalorder %s155, %s157
      %p161 = scmp.eq.s32.totalorder %s16, 0
      %p162 = por %p160, %p161
      %p163 = scmp.ne.s32.totalorder %s155, %s157
      %p164 = scmp.eq.s32.totalorder %s21, 1
      %p165 = por %p163, %p164
      %p166 = scmp.ne.s32.totalorder %s157, %s158
      %p167 = scmp.eq.s32.totalorder %s21, 0
      %p168 = por %p166, %p167
      %p169 = scmp.ne.s32.totalorder %s157, %s158
      %p170 = scmp.eq.s32.totalorder %s22, 1
      %p171 = por %p169, %p170
      %p173 = scmp.ne.s32.totalorder %s158, %s172
      %p174 = scmp.eq.s32.totalorder %s22, 0
      %p175 = por %p173, %p174
      %s176 = ssub.s32 %s16, %s23
      %p177 = scmp.eq.s32.totalorder %s176, 0
      %s179 = sadd.s32 %s178, 1
      %s180 = scalar_select %p177, %s178, %s179
      %p183 = pneg %p177
      %p184 = scmp.eq.s32.totalorder %s16, 1
      %p185 = por %p183, %p184
      %p186 = scmp.ne.s32.totalorder %s178, %s181
      %p187 = scmp.eq.s32.totalorder %s16, 0
      %p188 = por %p186, %p187
      %p189 = scmp.ne.s32.totalorder %s178, %s181
      %p190 = scmp.eq.s32.totalorder %s21, 1
      %p191 = por %p189, %p190
      %p192 = scmp.ne.s32.totalorder %s181, %s182
      %p193 = scmp.eq.s32.totalorder %s21, 0
      %p194 = por %p192, %p193
      %p195 = scmp.ne.s32.totalorder %s181, %s182
      %p196 = scmp.eq.s32.totalorder %s22, 1
      %p197 = por %p195, %p196
      %p199 = scmp.ne.s32.totalorder %s182, %s198
      %p200 = scmp.eq.s32.totalorder %s22, 0
      %p201 = por %p199, %p200
      %p202 = scmp.le.s32.totalorder 1, %s16
      %p203 = scmp.lt.s32.totalorder %s16, 3
      %p204 = pnand %p202, %p203
      %p205 = pneg %p204
      // Predicated region
      $region9: #{tpu_custom_call.1} parent=5 // pred_check
        _
      $region10: #{tpu_custom_call.1} parent=5 // pred_check_branch
        %207 = sbr.rel (%p204) target = $region12
      $region11: #{tpu_custom_call.1} parent=5 // pred_region
        %s208 = ssub.s32 %s16, 1
        // Predicated region
        $region13: #{tpu_custom_call.1} parent=11 // pred_check
          %p209 = pneg %p63
        $region14: #{tpu_custom_call.1} parent=11 // pred_check_branch
          %211 = sbr.rel (%p209) target = $region16
        $region15: #{tpu_custom_call.1} parent=11 // pred_region
          _
        $region16: #{tpu_custom_call.1} parent=11 // pred_fallthru
          _
        // Predicated region
        $region17: #{tpu_custom_call.1} parent=11 // pred_check
          %p212 = pneg %p84
        $region18: #{tpu_custom_call.1} parent=11 // pred_check_branch
          %214 = sbr.rel (%p212) target = $region20
        $region19: #{tpu_custom_call.1} parent=11 // pred_region
          _
        $region20: #{tpu_custom_call.1} parent=11 // pred_fallthru
          _
        // Predicated region
        $region21: #{tpu_custom_call.1} parent=11 // pred_check
          %p215 = pneg %p105
        $region22: #{tpu_custom_call.1} parent=11 // pred_check_branch
          %217 = sbr.rel (%p215) target = $region24
        $region23: #{tpu_custom_call.1} parent=11 // pred_region
          _
        $region24: #{tpu_custom_call.1} parent=11 // pred_fallthru
          _
        // Predicated region
        $region25: #{tpu_custom_call.1} parent=11 // pred_check
          %p218 = pneg %p126
        $region26: #{tpu_custom_call.1} parent=11 // pred_check_branch
          %220 = sbr.rel (%p218) target = $region28
        $region27: #{tpu_custom_call.1} parent=11 // pred_region
          _
        $region28: #{tpu_custom_call.1} parent=11 // pred_fallthru
          _
        // Predicated region
        $region29: #{tpu_custom_call.1} parent=11 // pred_check
          %p221 = pneg %p147
        $region30: #{tpu_custom_call.1} parent=11 // pred_check_branch
          %223 = sbr.rel (%p221) target = $region32
        $region31: #{tpu_custom_call.1} parent=11 // pred_region
          _
        $region32: #{tpu_custom_call.1} parent=11 // pred_fallthru
          _
        // Predicated region
        $region33: #{tpu_custom_call.1} parent=11 // pred_check
          %p224 = pneg %p168
        $region34: #{tpu_custom_call.1} parent=11 // pred_check_branch
          %226 = sbr.rel (%p224) target = $region36
        $region35: #{tpu_custom_call.1} parent=11 // pred_region
          _
        $region36: #{tpu_custom_call.1} parent=11 // pred_fallthru
          _
      $region12: #{tpu_custom_call.1} parent=5 // pred_fallthru
        _
      %p227 = scmp.lt.s32.totalorder %s16, 2
      // Predicated region
      $region37: #{tpu_custom_call.1} parent=5 // pred_check
        %p228 = pneg %p227
      $region38: #{tpu_custom_call.1} parent=5 // pred_check_branch
        %230 = sbr.rel (%p228) target = $region40
      $region39: #{tpu_custom_call.1} parent=5 // pred_region
        // Predicated region
        $region41: #{tpu_custom_call.1} parent=39 // pred_check
          %p231 = pneg %p36
        $region42: #{tpu_custom_call.1} parent=39 // pred_check_branch
          %233 = sbr.rel (%p231) target = $region44
        $region43: #{tpu_custom_call.1} parent=39 // pred_region
          %p234 = scmp.lt.s32.totalorder %s16, 1
          %s235 = scalar_select %p234, %s16, 1
          %s236 = smul.addr %s235, 8
          %s237 = scalar_lea.vmem %s0, %s236
        $region44: #{tpu_custom_call.1} parent=39 // pred_fallthru
          _
      $region40: #{tpu_custom_call.1} parent=5 // pred_fallthru
        _
      %p238 = scmp.le.s32.totalorder 1, %s16
      %p239 = scmp.lt.s32.totalorder %s16, 3
      %p240 = pnand %p238, %p239
      %p241 = pneg %p240
      // Predicated region
      $region45: #{tpu_custom_call.1} parent=5 // pred_check
        _
      $region46: #{tpu_custom_call.1} parent=5 // pred_check_branch
        %243 = sbr.rel (%p240) target = $region48
      $region47: #{tpu_custom_call.1} parent=5 // pred_region
        %s244 = ssub.s32 %s16, 1
        %p245 = scmp.lt.s32.totalorder %s21, 1
        %s246 = scalar_select %p245, %s21, 1
        %s247 = smul.addr %s246, 8
        %s248 = scalar_lea.vmem %s0, %s247
        %p249 = pneg %p42
        %p250 = pneg %p39
        %p251 = pneg %p63
        %p252 = pneg %p60
        %p253 = pneg %p84
        %p254 = pneg %p81
        %p255 = pneg %p105
        %p256 = pneg %p102
        %p257 = pneg %p126
        %p258 = pneg %p123
        %p259 = pneg %p147
        %p260 = pneg %p144
        %p261 = pneg %p168
        %p262 = pneg %p165
        %p263 = pneg %p194
        %p264 = pneg %p191
        %s265 = sand.u32 %s181, 1
        %s266 = scalar_lea.sflag [#allocation3], %s265
        %s267 = sand.u32 %s181, 1
        %s268 = smul.addr %s267, 8
        %s269 = scalar_lea.vmem [#allocation2], %s268
        %p270 = scmp.lt.s32.totalorder %s21, 1
        %s271 = scalar_select %p270, %s21, 1
        %s272 = smul.addr %s271, 8
        %s273 = scalar_lea.vmem %s0, %s272
        %v274 = vld [vmem:[%s273] sm:$0xff]
        %v275 = vld [vmem:[%s1] sm:$0x1]
        %v276 = vld [vmem:[%s2] sm:$0x1]
        %vm277 = vcmask 261120
        %v278 = vsel %vm277, %v274, 0.0
        %279 = vadd.xlane.f32.xlu0 %v278
        %v280 = vpop.xlane.xlu0 %279
        %v281 = vrcp.pop 32.0
        %v282 = vmul.f32 %v280, %v281
        %v283 = vsub.f32 %v274, %v282
        %v284 = vmul.f32 %v283, %v283
        %v285 = vsel %vm277, %v284, 0.0
        %286 = vadd.xlane.f32.xlu0 %v285
        %v287 = vpop.xlane.xlu0 %286
        %v288 = vmul.f32 %v287, %v281
        %v289 = vadd.f32 %v288, 1e-06
        %v290 = vrsqrt.pop %v289
        %v291 = vmul.f32 %v283, %v290
        %v293 = vlaneseq
        %v294 = vshrl.u32 %v293, 7
        %v295 = vsub.s32 0, %v294
        %v296 = vrot.slane %v275, %v295
        %v298 = vmul.f32 %v291, %v296
        %v300 = vlaneseq
        %v301 = vshrl.u32 %v300, 7
        %v302 = vsub.s32 0, %v301
        %v303 = vrot.slane %v276, %v302
        %v305 = vadd.f32 %v298, %v303
        %v306 = vld [vmem:[%s3] sm:$0xff]
        %v307 = vld [vmem:[%s3 + $0x8] sm:$0xff]
        %v308 = vld [vmem:[%s3 + $0x10] sm:$0xff]
        %v309 = vld [vmem:[%s3 + $0x18] sm:$0xff]
        %v310 = vld [vmem:[%s4] sm:$0x1]
        %v312 = vlaneseq
        %v313 = vshrl.u32 %v312, 7
        %v314 = vsub.s32 0, %v313
        %v315 = vrot.slane %v310, %v314
        %v318 = vsel %vm277, %v305, 0
        %320 = vmatprep.subr.mxu0 0.0
        %321 = vmatpush1.msra.mxu0 0.0
        %322 = vmatprep.subr.mxu0 0.0
        %323 = vmatpush1.msra.mxu0 0.0
        %324 = vmatprep.subr.mxu0 0.0
        %325 = vmatpush1.msra.mxu0 0.0
        %326 = vmatprep.subr.mxu0 0.0
        %327 = vmatpush1.msra.mxu0 0.0
        %328 = vmatprep.subr.mxu0 0.0
        %329 = vmatpush1.msra.mxu0 0.0
        %330 = vmatprep.subr.mxu0 0.0
        %331 = vmatpush1.msra.mxu0 0.0
        %332 = vmatprep.subr.mxu0 0.0
        %333 = vmatpush1.msra.mxu0 0.0
        %334 = vmatprep.subr.mxu0 0.0
        %335 = vmatpush1.msra.mxu0 0.0
        %336 = vmatprep.subr.mxu0 0.0
        %337 = vmatpush1.msra.mxu0 0.0
        %338 = vmatprep.subr.mxu0 0.0
        %339 = vmatpush1.msra.mxu0 0.0
        %340 = vmatprep.subr.mxu0 0.0
        %341 = vmatpush1.msra.mxu0 0.0
        %342 = vmatprep.subr.mxu0 0.0
        %343 = vmatpush1.msra.mxu0 0.0
        %344 = vmatprep.subr.mxu0 0.0
        %345 = vmatpush1.msra.mxu0 %v309
        %346 = vmatprep.subr.mxu0 0.0
        %347 = vmatpush1.msra.mxu0 %v308
        %348 = vmatprep.subr.mxu0 0.0
        %349 = vmatpush1.msra.mxu0 %v307
        %350 = vmatprep.subr.mxu0 0.0
        %351 = vmatpush1.msra.mxu0 %v306
        %352 = vmatprep.subr.mxu0 0.0
        %353 = vmatpush2.msra.mxu0 0.0
        %354 = vmatprep.subr.mxu0 0.0
        %355 = vmatpush2.msra.mxu0 0.0
        %356 = vmatprep.subr.mxu0 0.0
        %357 = vmatpush2.msra.mxu0 0.0
        %358 = vmatprep.subr.mxu0 0.0
        %359 = vmatpush2.msra.mxu0 0.0
        %360 = vmatprep.subr.mxu0 0.0
        %361 = vmatpush2.msra.mxu0 0.0
        %362 = vmatprep.subr.mxu0 0.0
        %363 = vmatpush2.msra.mxu0 0.0
        %364 = vmatprep.subr.mxu0 0.0
        %365 = vmatpush2.msra.mxu0 0.0
        %366 = vmatprep.subr.mxu0 0.0
        %367 = vmatpush2.msra.mxu0 0.0
        %368 = vmatprep.subr.mxu0 0.0
        %369 = vmatpush2.msra.mxu0 0.0
        %370 = vmatprep.subr.mxu0 0.0
        %371 = vmatpush2.msra.mxu0 0.0
        %372 = vmatprep.subr.mxu0 0.0
        %373 = vmatpush2.msra.mxu0 0.0
        %374 = vmatprep.subr.mxu0 0.0
        %375 = vmatpush2.msra.mxu0 0.0
        %376 = vmatprep.subr.mxu0 0.0
        %377 = vmatpush2.msra.mxu0 0.0
        %378 = vmatprep.subr.mxu0 0.0
        %379 = vmatpush2.msra.mxu0 0.0
        %380 = vmatprep.subr.mxu0 0.0
        %381 = vmatpush2.msra.mxu0 0.0
        %382 = vmatprep.subr.mxu0 0.0
        %383 = vmatpush2.msra.mxu0 0.0
        %384 = vmatprep.mubr.f32.mxu0 0.0
        %385 = vmatmul.mubr.f32.gmra.mxu0 %v318
        %v386 = vpop.f32.mrf.mxu0
        %v387 = vadd.f32 %v315, %v386
        %v388 = vpop.f32.mrf.mxu0
        %389 = vdwg.mxu0
        %v390 = vmax.f32 %v387, 0.0
        %v391 = vld [vmem:[%s5] sm:$0xff]
        %v392 = vld [vmem:[%s5 + $0x8] sm:$0xff]
        %v393 = vld [vmem:[%s5 + $0x10] sm:$0xff]
        %v394 = vld [vmem:[%s5 + $0x18] sm:$0xff]
        %v395 = vld [vmem:[%s5 + $0x20] sm:$0xff]
        %v396 = vld [vmem:[%s5 + $0x28] sm:$0xff]
        %v397 = vld [vmem:[%s5 + $0x30] sm:$0xff]
        %v398 = vld [vmem:[%s5 + $0x38] sm:$0xff]
        %v399 = vld [vmem:[%s6] sm:$0x1]
        %v401 = vlaneseq
        %v402 = vshrl.u32 %v401, 7
        %v403 = vsub.s32 0, %v402
        %v404 = vrot.slane %v399, %v403
        %vm406 = vcmask 523264
        %v408 = vsel %vm406, %v390, 0
        %410 = vmatprep.subr.mxu0 0.0
        %411 = vmatpush1.msra.mxu0 0.0
        %412 = vmatprep.subr.mxu0 0.0
        %413 = vmatpush1.msra.mxu0 0.0
        %414 = vmatprep.subr.mxu0 0.0
        %415 = vmatpush1.msra.mxu0 0.0
        %416 = vmatprep.subr.mxu0 0.0
        %417 = vmatpush1.msra.mxu0 0.0
        %418 = vmatprep.subr.mxu0 0.0
        %419 = vmatpush1.msra.mxu0 0.0
        %420 = vmatprep.subr.mxu0 0.0
        %421 = vmatpush1.msra.mxu0 0.0
        %422 = vmatprep.subr.mxu0 0.0
        %423 = vmatpush1.msra.mxu0 0.0
        %424 = vmatprep.subr.mxu0 0.0
        %425 = vmatpush1.msra.mxu0 0.0
        %426 = vmatprep.subr.mxu0 0.0
        %427 = vmatpush1.msra.mxu0 %v398
        %428 = vmatprep.subr.mxu0 0.0
        %429 = vmatpush1.msra.mxu0 %v397
        %430 = vmatprep.subr.mxu0 0.0
        %431 = vmatpush1.msra.mxu0 %v396
        %432 = vmatprep.subr.mxu0 0.0
        %433 = vmatpush1.msra.mxu0 %v395
        %434 = vmatprep.subr.mxu0 0.0
        %435 = vmatpush1.msra.mxu0 %v394
        %436 = vmatprep.subr.mxu0 0.0
        %437 = vmatpush1.msra.mxu0 %v393
        %438 = vmatprep.subr.mxu0 0.0
        %439 = vmatpush1.msra.mxu0 %v392
        %440 = vmatprep.subr.mxu0 0.0
        %441 = vmatpush1.msra.mxu0 %v391
        %442 = vmatprep.subr.mxu0 0.0
        %443 = vmatpush2.msra.mxu0 0.0
        %444 = vmatprep.subr.mxu0 0.0
        %445 = vmatpush2.msra.mxu0 0.0
        %446 = vmatprep.subr.mxu0 0.0
        %447 = vmatpush2.msra.mxu0 0.0
        %448 = vmatprep.subr.mxu0 0.0
        %449 = vmatpush2.msra.mxu0 0.0
        %450 = vmatprep.subr.mxu0 0.0
        %451 = vmatpush2.msra.mxu0 0.0
        %452 = vmatprep.subr.mxu0 0.0
        %453 = vmatpush2.msra.mxu0 0.0
        %454 = vmatprep.subr.mxu0 0.0
        %455 = vmatpush2.msra.mxu0 0.0
        %456 = vmatprep.subr.mxu0 0.0
        %457 = vmatpush2.msra.mxu0 0.0
        %458 = vmatprep.subr.mxu0 0.0
        %459 = vmatpush2.msra.mxu0 0.0
        %460 = vmatprep.subr.mxu0 0.0
        %461 = vmatpush2.msra.mxu0 0.0
        %462 = vmatprep.subr.mxu0 0.0
        %463 = vmatpush2.msra.mxu0 0.0
        %464 = vmatprep.subr.mxu0 0.0
        %465 = vmatpush2.msra.mxu0 0.0
        %466 = vmatprep.subr.mxu0 0.0
        %467 = vmatpush2.msra.mxu0 0.0
        %468 = vmatprep.subr.mxu0 0.0
        %469 = vmatpush2.msra.mxu0 0.0
        %470 = vmatprep.subr.mxu0 0.0
        %471 = vmatpush2.msra.mxu0 0.0
        %472 = vmatprep.subr.mxu0 0.0
        %473 = vmatpush2.msra.mxu0 0.0
        %474 = vmatprep.mubr.f32.mxu0 0.0
        %475 = vmatmul.mubr.f32.gmra.mxu0 %v408
        %v476 = vpop.f32.mrf.mxu0
        %v477 = vadd.f32 %v404, %v476
        %v478 = vpop.f32.mrf.mxu0
        %479 = vdwg.mxu0
        %480 = vst.msk [vmem:[%s269] sm:$0xff] %vm277, %v477
        %s481 = sand.u32 %s181, 1
        %s482 = scalar_lea.sflag [#allocation3], %s481
        %s483 = sand.u32 %s181, 1
        %s484 = smul.addr %s483, 8
        %s485 = scalar_lea.vmem [#allocation2], %s484
        // Predicated region
        $region49: #{tpu_custom_call.1} parent=47 // pred_check
          %p486 = pneg %p191
        $region50: #{tpu_custom_call.1} parent=47 // pred_check_branch
          %488 = sbr.rel (%p486) target = $region52
        $region51: #{tpu_custom_call.1} parent=47 // pred_region
          %s490 = ssub.s32 128, 128
          %491 = vsyncadd %s482, %s490
          %s492 = smul.addr %s21, 128
          %s493 = scalar_lea.hbm %s7, %s492
          %s495 = sshll.u32 %s485, 4
          %s496 = int_to_ptr.vmem [resolvable:$true] %s495
          %498 = dma.vmem_to_hbm [thread:$0]  %s496, 128, %s493, %s482
        $region52: #{tpu_custom_call.1} parent=47 // pred_fallthru
          _
      $region48: #{tpu_custom_call.1} parent=5 // pred_fallthru
        _
      %p499 = scmp.le.s32.totalorder 2, %s16
      // Predicated region
      $region53: #{tpu_custom_call.1} parent=5 // pred_check
        %p500 = pneg %p499
      $region54: #{tpu_custom_call.1} parent=5 // pred_check_branch
        %502 = sbr.rel (%p500) target = $region56
      $region55: #{tpu_custom_call.1} parent=5 // pred_region
        %s503 = ssub.s32 %s16, 2
        // Predicated region
        $region57: #{tpu_custom_call.1} parent=55 // pred_check
          %p504 = pneg %p197
        $region58: #{tpu_custom_call.1} parent=55 // pred_check_branch
          %506 = sbr.rel (%p504) target = $region60
        $region59: #{tpu_custom_call.1} parent=55 // pred_region
          %s507 = sand.u32 %s182, 1
          %s508 = scalar_lea.sflag [#allocation3], %s507
          %s509 = sand.u32 %s182, 1
          %s510 = smul.addr %s509, 8
          %s511 = scalar_lea.vmem [#allocation2], %s510
          %512 = dma.done %s508, 128
        $region60: #{tpu_custom_call.1} parent=55 // pred_fallthru
          _
      $region56: #{tpu_custom_call.1} parent=5 // pred_fallthru
        _
    $region6: #{tpu_custom_call.1} parent=1 // loop_footer
      %s20 = sadd.s32 1, %s16
    $region7: #{tpu_custom_call.1} parent=1 // loop_footer_branch
      %15 = sbr.rel target = $region3
    $region8: #{tpu_custom_call.1} parent=1 // loop_exit
      _
    %513 = vsyncpa [#allocation3], 1
    %s514 = scalar_lea.sflag [#allocation3], 1
    %515 = vsyncpa %s514, 1

</llo_original>
